<compile_context>
chip_gen: v5e
topology: v5e:2x2
jax: 0.10.0
libtpu: 0.0.40
codegen_flags: <defaults>
</compile_context>

<pallas_src>
import functools

import jax
import jax.numpy as jnp
from jax.experimental import pallas as pl
from jax.experimental.pallas import tpu as pltpu

_MEAN = 0.5              # tvf.Normalize(mean=[0.5, 0.5, 0.5], ...)
_STD = 0.225             # tvf.Normalize(..., std=[0.225, 0.225, 0.225])
_INV_STD = 1.0 / _STD    # multiply, don't divide (VALU slack stays free)


# ----------------------------------------------------------------------------
# layout helper: plan a lane/sublane-dense (rows, 128) view of a length-n axis
# ----------------------------------------------------------------------------
def _plan_rows(n, *, max_rows, align=8):
    """Returns (n_pad, R, r_tile, steps) with n_pad = R*128 >= n, R = steps*r_tile,
    r_tile % align == 0.  Never returns tiny/odd tiles (no divisor hunting)."""
    lanes = 128
    r_needed = -(-n // lanes)                       # rows needed to hold n
    r_needed = -(-r_needed // align) * align        # sublane-align row count
    max_rows = max(align, (max_rows // align) * align)
    r_tile = min(max_rows, r_needed)
    steps = -(-r_needed // r_tile)
    R = steps * r_tile
    return R * lanes, R, r_tile, steps


# ----------------------------------------------------------------------------
# Kernel 1: RGB normalization (is_test=True path of PointModel.forward)
#   (B, C*H*W) viewed as (B, R, 128); blocks (1, r_tile, 128) -> full vregs
# ----------------------------------------------------------------------------
def _normalize_kernel(x_ref, o_ref):
    x = x_ref[...].astype(jnp.float32)
    o_ref[...] = ((x - _MEAN) * _INV_STD).astype(o_ref.dtype)


def normalize_rgb(img, *, max_block_bytes=1 << 20):
    """img: (B, C, H, W). Returns same shape/dtype."""
    B, C, H, W = img.shape
    n = C * H * W
    itemsize = jnp.dtype(img.dtype).itemsize
    # ~1 MiB per block (past the measured roofline knee); in+out double-buffered
    # stays ~4 MiB -> fits every generation's default scoped VMEM.
    max_rows = max(8, max_block_bytes // (128 * itemsize))
    n_pad, R, r_tile, steps = _plan_rows(n, max_rows=max_rows, align=8)

    flat = img.reshape(B, n)
    if n_pad != n:
        flat = jnp.pad(flat, ((0, 0), (0, n_pad - n)))
    flat = flat.reshape(B, R, 128)

    out = pl.pallas_call(
        _normalize_kernel,
        out_shape=jax.ShapeDtypeStruct((B, R, 128), img.dtype),
        grid=(B, steps),
        in_specs=[pl.BlockSpec((1, r_tile, 128), lambda b, s: (b, s, 0))],
        out_specs=pl.BlockSpec((1, r_tile, 128), lambda b, s: (b, s, 0)),
        compiler_params=pltpu.CompilerParams(
            dimension_semantics=("parallel", "parallel")),
    )(flat)

    out = out.reshape(B, n_pad)
    if n_pad != n:
        out = out[:, :n]
    return out.reshape(B, C, H, W)


# ----------------------------------------------------------------------------
# Kernel 2 (fused): coord normalize -> homography warp -> perspective divide
#                   -> de-normalize -> border + OOB mask, all in one pass.
#   Layout: (B, 2, R, 128) channel-first planes; blocks (None, 2, r_tile, 128).
#   Homographies via scalar prefetch (SMEM, loaded once before the grid).
# ----------------------------------------------------------------------------
def _coord_warp_kernel(hom_ref, coord_ref, snorm_ref, wnorm_ref, wpix_ref,
                       mask_ref, *, half_w, half_h, hc, wc, n, r_tile):
    b = pl.program_id(0)
    s = pl.program_id(1)

    x = coord_ref[0, :, :].astype(jnp.float32) * (1.0 / half_w) - 1.0  # (r_tile,128)
    y = coord_ref[1, :, :].astype(jnp.float32) * (1.0 / half_h) - 1.0

    # normalized source coords (fused; no JAX-side stack)
    snorm_ref[0, :, :] = x.astype(snorm_ref.dtype)
    snorm_ref[1, :, :] = y.astype(snorm_ref.dtype)

    h00 = hom_ref[b, 0]; h01 = hom_ref[b, 1]; h02 = hom_ref[b, 2]
    h10 = hom_ref[b, 3]; h11 = hom_ref[b, 4]; h12 = hom_ref[b, 5]
    h20 = hom_ref[b, 6]; h21 = hom_ref[b, 7]; h22 = hom_ref[b, 8]

    X = x * h00 + y * h01 + h02
    Y = x * h10 + y * h11 + h12
    Z = x * h20 + y * h21 + h22
    # NOTE: like the PyTorch reference, Z ~ 0 produces inf/nan (no guard).
    # approx=True would be slightly cheaper but perturbs the +/-1 mask boundary.
    inv_z = pl.reciprocal(Z, approx=False)
    wx = X * inv_z
    wy = Y * inv_z

    # direct sub-row stores (no concatenate -> no XLU relayout)
    wnorm_ref[0, :, :] = wx.astype(wnorm_ref.dtype)
    wnorm_ref[1, :, :] = wy.astype(wnorm_ref.dtype)
    wpix_ref[0, :, :] = ((wx + 1.0) * half_w).astype(wpix_ref.dtype)
    wpix_ref[1, :, :] = ((wy + 1.0) * half_h).astype(wpix_ref.dtype)

    # fused border + OOB mask: recover (row, col) of each flattened element
    rr = jax.lax.broadcasted_iota(jnp.int32, (r_tile, 128), 0)
    ll = jax.lax.broadcasted_iota(jnp.int32, (r_tile, 128), 1)
    idx = (s * r_tile + rr) * 128 + ll
    row = idx // wc
    col = idx - row * wc
    inb = (wx < 1.0) & (wx > -1.0) & (wy < 1.0) & (wy > -1.0)
    border = (row > 0) & (row < hc - 1) & (col > 0) & (col < wc - 1) & (idx < n)
    mask_ref[...] = (border & inb).astype(mask_ref.dtype)


def warp_and_mask(source_coord, homographies, img_h, img_w,
                  *, max_block_bytes=2 << 20):
    """source_coord: (B, 2, hc, wc) pixel coords; homographies: (B, 3, 3).

    Returns (all channel-first / lane-dense):
      source_norm: (B, 2, hc, wc) normalized source coords
      warped_norm: (B, 2, hc, wc) warped coords in [-1, 1] space
      warped_pix:  (B, 2, hc, wc) warped coords back in pixels
      border_mask: (B, hc, wc)    bool (border & in-bounds)
    """
    B, _, hc, wc = source_coord.shape
    n = hc * wc
    # bytes per sublane-row across all blocks: 8 f32 planes + 1 int8 mask plane
    bytes_per_row = 128 * (8 * 4 + 1)
    max_rows = max(32, max_block_bytes // bytes_per_row)
    n_pad, R, r_tile, steps = _plan_rows(n, max_rows=max_rows, align=32)

    coord = source_coord.reshape(B, 2, n).astype(jnp.float32)
    if n_pad != n:
        coord = jnp.pad(coord, ((0, 0), (0, 0), (0, n_pad - n)))
    coord = coord.reshape(B, 2, R, 128)
    hom = homographies.reshape(B, 9).astype(jnp.float32)

    half_w = float(img_w - 1) / 2.0
    half_h = float(img_h - 1) / 2.0
    kern = functools.partial(_coord_warp_kernel, half_w=half_w, half_h=half_h,
                             hc=hc, wc=wc, n=n, r_tile=r_tile)

    vec_spec = pl.BlockSpec((None, 2, r_tile, 128),
                            lambda b, s, hom_s: (b, 0, s, 0))
    mask_spec = pl.BlockSpec((None, r_tile, 128),
                             lambda b, s, hom_s: (b, s, 0))

    snorm, wnorm, wpix, mask = pl.pallas_call(
        kern,
        out_shape=(jax.ShapeDtypeStruct((B, 2, R, 128), jnp.float32),
                   jax.ShapeDtypeStruct((B, 2, R, 128), jnp.float32),
                   jax.ShapeDtypeStruct((B, 2, R, 128), jnp.float32),
                   jax.ShapeDtypeStruct((B, R, 128), jnp.int8)),
        grid_spec=pltpu.PrefetchScalarGridSpec(
            num_scalar_prefetch=1,
            grid=(B, steps),
            in_specs=[vec_spec],
            out_specs=(vec_spec, vec_spec, vec_spec, mask_spec)),
        compiler_params=pltpu.CompilerParams(
            dimension_semantics=("parallel", "parallel")),
    )(hom, coord)

    def _unpad2(a):
        a = a.reshape(B, 2, n_pad)
        if n_pad != n:
            a = a[:, :, :n]
        return a.reshape(B, 2, hc, wc)

    mask = mask.reshape(B, n_pad)
    if n_pad != n:
        mask = mask[:, :n]
    mask = (mask > 0).reshape(B, hc, wc)

    return _unpad2(snorm), _unpad2(wnorm), _unpad2(wpix), mask


# ----------------------------------------------------------------------------
# Kernel 3: descriptor fusion  desc = desc2 * aware[:,0] + desc3 * aware[:,1]
#   desc blocks (1, D, tile): D on sublanes, 128-multiple tile on lanes.
#   Math stays in the input dtype (bf16 inputs -> bf16 VALU on v6e/v7x).
# ----------------------------------------------------------------------------
def _desc_fuse_kernel(d2_ref, d3_ref, aw_ref, o_ref):
    d2 = d2_ref[...]                                   # (1, D, t)
    d3 = d3_ref[...]
    aw = aw_ref[...]                                   # (1, 2, t)
    aw0 = aw[:, 0:1, :].astype(d2.dtype)
    aw1 = aw[:, 1:2, :].astype(d2.dtype)
    o_ref[...] = (d2 * aw0 + d3 * aw1).astype(o_ref.dtype)


def fuse_descriptors(desc2, desc3, aware, *, max_block_bytes=3 << 20):
    """desc2/desc3: (B, D, H, W); aware: (B, 2, H, W)."""
    B, D, H, W = desc2.shape
    n = H * W
    itemsize = jnp.dtype(desc2.dtype).itemsize
    aw_itemsize = jnp.dtype(aware.dtype).itemsize
    bytes_per_col = 3 * D * itemsize + 2 * aw_itemsize          # d2+d3+out+aware
    max_cols = max(128, max_block_bytes // bytes_per_col)
    n128 = -(-n // 128) * 128
    tile = max(128, min((max_cols // 128) * 128, n128))         # always 128-multiple
    steps = -(-n128 // tile)
    n_pad = steps * tile

    def _prep(a, c):
        a = a.reshape(B, c, n)
        if n_pad != n:
            a = jnp.pad(a, ((0, 0), (0, 0), (0, n_pad - n)))
        return a

    d2 = _prep(desc2, D)
    d3 = _prep(desc3, D)
    aw = _prep(aware, 2)

    out = pl.pallas_call(
        _desc_fuse_kernel,
        out_shape=jax.ShapeDtypeStruct((B, D, n_pad), desc2.dtype),
        grid=(B, steps),
        in_specs=[pl.BlockSpec((1, D, tile), lambda b, s: (b, 0, s)),
                  pl.BlockSpec((1, D, tile), lambda b, s: (b, 0, s)),
                  pl.BlockSpec((1, 2, tile), lambda b, s: (b, 0, s))],
        out_specs=pl.BlockSpec((1, D, tile), lambda b, s: (b, 0, s)),
        compiler_params=pltpu.CompilerParams(
            dimension_semantics=("parallel", "parallel")),
    )(d2, d3, aw)

    if n_pad != n:
        out = out[:, :, :n]
    return out.reshape(B, D, H, W)


# ----------------------------------------------------------------------------
# PointModel-level forward logic
# ----------------------------------------------------------------------------
class PointModelPallas:
    def __init__(self, is_test=True):
        self.is_test = is_test
        # TODO(synk): InterestPointModule / CorrespondenceModule sub-modules were
        # not provided; only the PointModel-level math is implemented here.

    def forward_test(self, img):
        """is_test=True path: img -> norm_rgb -> interestpoint_module."""
        img_n = normalize_rgb(img)
        # TODO(synk): InterestPointModule (score/coord/desc heads) not available;
        # returning the normalized image instead of (score, coord, desc).
        return img_n

    def training_branch_math(self, img_shape, source_coord, homographies,
                             source_desc_block):
        """Reproduces the is_test=False coordinate / warp / mask / descriptor math
        given the InterestPointModule outputs."""
        B, _, H, W = img_shape

        # One fused Pallas pass: normalize -> warp -> divide -> denorm -> masks.
        # NOTE: coord outputs stay channel-first (B,2,hc,wc); the reference's
        # (B,hc,wc,2) permute is deferred to consumers (lane-dense layout).
        source_coord_norm, warped_norm, target_coord_warped, border_mask = \
            warp_and_mask(source_coord, homographies, H, W)

        # descriptor fusion (Pallas)
        desc2, desc3, aware = source_desc_block
        source_desc = fuse_descriptors(desc2, desc3, aware)

        # TODO(synk): grid_sample resampling of score/desc maps and the
        # CorrespondenceModule confidence matrix depend on undefined sub-modules.
        return {
            "source_coord_norm": source_coord_norm,          # (B, 2, hc, wc)
            "target_coord_warped_norm": warped_norm,         # (B, 2, hc, wc)
            "target_coord_warped": target_coord_warped,      # (B, 2, hc, wc)
            "border_mask": border_mask,                      # (B, hc, wc) bool
            "source_desc": source_desc,
            "source_aware": aware,
        }


# ----------------------------------------------------------------------------
if __name__ == "__main__":
    key = jax.random.PRNGKey(0)
    k_img, k_hom, k_d2, k_d3, k_aw = jax.random.split(key, 5)

    B, C, H, W = 2, 3, 16, 16          # input image (NCHW)
    hc, wc, D = 8, 8, 32               # interest-point head resolution / desc dim

    model = PointModelPallas(is_test=True)

    # --- is_test=True path: normalization kernel -----------------------------
    img = jax.random.uniform(k_img, (B, C, H, W), dtype=jnp.float32)
    img_n = model.forward_test(img)
    jax.block_until_ready(img_n)
    img_n_ref = (img - _MEAN) / _STD
    assert jnp.allclose(img_n, img_n_ref, atol=1e-5), "normalize mismatch"

    # --- synthetic InterestPointModule outputs (deterministic) ---------------
    yy, xx = jnp.meshgrid(jnp.arange(hc, dtype=jnp.float32) * (H / hc),
                          jnp.arange(wc, dtype=jnp.float32) * (W / wc),
                          indexing="ij")
    source_coord = jnp.broadcast_to(jnp.stack([xx, yy], axis=0),
                                    (B, 2, hc, wc)).astype(jnp.float32)

    homographies = (jnp.eye(3, dtype=jnp.float32)[None]
                    + 0.05 * jax.random.normal(k_hom, (B, 3, 3), dtype=jnp.float32))

    desc2 = jax.random.normal(k_d2, (B, D, hc, wc), dtype=jnp.float32)
    desc3 = jax.random.normal(k_d3, (B, D, hc, wc), dtype=jnp.float32)
    aware = jax.nn.softmax(
        jax.random.normal(k_aw, (B, 2, hc, wc), dtype=jnp.float32), axis=1)

    out = model.training_branch_math((B, C, H, W), source_coord, homographies,
                                     (desc2, desc3, aware))
    jax.block_until_ready(out)

    # --- reference checks (pure JAX, channel-last for the warp ref) ----------
    scn_ref = jnp.stack([source_coord[:, 0] / (float(W - 1) / 2.0) - 1.0,
                         source_coord[:, 1] / (float(H - 1) / 2.0) - 1.0], axis=-1)
    assert jnp.allclose(jnp.transpose(out["source_coord_norm"], (0, 2, 3, 1)),
                        scn_ref, atol=1e-5), "source_coord_norm mismatch"

    def _warp_ref_one(src, hom):
        pts = src.reshape(-1, 2)
        p3 = pts @ hom[:, :2].T + hom[:, 2]
        p3 = p3 / p3[:, 2:3]
        return p3[:, :2].reshape(src.shape)

    warped_ref = jax.vmap(_warp_ref_one)(scn_ref, homographies)
    warped_got = jnp.transpose(out["target_coord_warped_norm"], (0, 2, 3, 1))
    assert jnp.allclose(warped_got, warped_ref, atol=1e-4), "homography warp mismatch"

    warped_pix_ref = jnp.stack(
        [(warped_ref[..., 0] + 1.0) * (float(W - 1) / 2.0),
         (warped_ref[..., 1] + 1.0) * (float(H - 1) / 2.0)], axis=1)
    assert jnp.allclose(out["target_coord_warped"], warped_pix_ref, atol=1e-3), \
        "warped pixel-coord mismatch"

    border = jnp.ones((B, hc, wc), dtype=jnp.float32)
    border = border.at[:, 0].set(0.0).at[:, hc - 1].set(0.0)
    border = border.at[:, :, 0].set(0.0).at[:, :, wc - 1].set(0.0)
    oob_ref = ((warped_ref[..., 0] < 1) & (warped_ref[..., 0] > -1)
               & (warped_ref[..., 1] < 1) & (warped_ref[..., 1] > -1))
    mask_ref = (border > 0.001) & oob_ref
    # ignore coords within float-rounding distance of the +/-1 decision boundary
    safe = ((jnp.abs(jnp.abs(warped_ref[..., 0]) - 1.0) > 1e-4)
            & (jnp.abs(jnp.abs(warped_ref[..., 1]) - 1.0) > 1e-4))
    assert jnp.array_equal(out["border_mask"] & safe, mask_ref & safe), \
        "border mask mismatch"

    desc_ref = desc2 * aware[:, 0:1] + desc3 * aware[:, 1:2]
    assert jnp.allclose(out["source_desc"], desc_ref, atol=1e-5), \
        "descriptor fusion mismatch"

    print("KERNEL_OK")
</pallas_src>

<mosaic_0001>
module attributes {stable_mosaic.version = 11 : i64} {
  func.func @_normalize_kernel(%arg0: i32, %arg1: i32, %arg2: memref<1x8x128xf32, #tpu.memory_space<vmem>>, %arg3: memref<1x8x128xf32, #tpu.memory_space<vmem>>) attributes {dimension_semantics = [#tpu.dimension_semantics<parallel>, #tpu.dimension_semantics<parallel>], iteration_bounds = array<i64: 2, 1>, scalar_prefetch = 0 : i64, scratch_operands = 0 : i64, tpu.core_type = #tpu.core_type<tc>, window_params = [{transform_indices = @transform_0, window_bounds = array<i64: 1, 8, 128>}, {transform_indices = @transform_1, window_bounds = array<i64: 1, 8, 128>}]} {
    %c0 = arith.constant 0 : index
    %c0_0 = arith.constant 0 : index
    %c0_1 = arith.constant 0 : index
    %0 = vector.load %arg2[%c0, %c0_0, %c0_1] : memref<1x8x128xf32, #tpu.memory_space<vmem>>, vector<1x8x128xf32>
    %cst = arith.constant 5.000000e-01 : f32
    %1 = vector.broadcast %cst : f32 to vector<1x8x128xf32>
    %2 = arith.subf %0, %1 : vector<1x8x128xf32>
    %cst_2 = arith.constant 4.44444466 : f32
    %3 = vector.broadcast %cst_2 : f32 to vector<1x8x128xf32>
    %4 = arith.mulf %2, %3 : vector<1x8x128xf32>
    %c0_3 = arith.constant 0 : index
    %c0_4 = arith.constant 0 : index
    %c0_5 = arith.constant 0 : index
    %5 = vector.load %arg3[%c0_3, %c0_4, %c0_5] : memref<1x8x128xf32, #tpu.memory_space<vmem>>, vector<1x8x128xf32>
    tpu.vector_store %arg3[%c0_3, %c0_4, %c0_5], %4 {strides = array<i32>} : memref<1x8x128xf32, #tpu.memory_space<vmem>>, vector<1x8x128xf32>,
    return
  }
  func.func @transform_0(%arg0: i32, %arg1: i32) -> (i32, i32, i32) {
    %c0_i32 = arith.constant 0 : i32
    %c0_i32_0 = arith.constant 0 : i32
    return %arg0, %arg1, %c0_i32 : i32, i32, i32
  }
  func.func @transform_1(%arg0: i32, %arg1: i32) -> (i32, i32, i32) {
    %c0_i32 = arith.constant 0 : i32
    %c0_i32_0 = arith.constant 0 : i32
    return %arg0, %arg1, %c0_i32 : i32, i32, i32
  }
}

</mosaic_0001>

<llo_original>
// kernel: tpu_custom_call.1
$region0: #{tpu_custom_call.1}
  #allocation0 [shape = 'u32[]', space=smem, size = 0x4, offset = 0x4, fixed_abs, tag = 'smem constant byte address 0x4 - core index']
  #allocation1 [shape = 'u32[72,128]{1,0:T(1,128)}', space=vmem, size = 0x9000, scoped, tag = 'internal scratch']
  %s0 = inlined_call_operand.hbm [shape: f32[2,8,128], index: 0, kind: input, shape index: {}]
  %s1 = inlined_call_operand.hbm [shape: f32[2,8,128], index: 1, kind: output, shape index: {}]
  %s2 = sld [smem:[#allocation0]]
  $region41: #{tpu_custom_call.1} parent=0
    _
  %s4 = ssub.s32 1, %s2
  %s5 = scalar_select 0, %s4, %s2
  $region1: #{tpu_custom_call.1} parent=0
    #allocation2 [shape = 'u8[8192]{0}', space=vmem, size = 0x2000, scoped, tag = 'input window, operand 0']
    #allocation3 [shape = 's32[2]{0}', space=sflag, size = 0x8, scoped, tag = 'scoped memory for tpu_custom_call.1']
    #allocation4 [shape = 's32[2]{0}', space=sflag, size = 0x8, scoped, tag = 'scoped memory for tpu_custom_call.1']
    #allocation5 [shape = 'u8[8192]{0}', space=vmem, size = 0x2000, scoped, tag = 'output window, operand 0']
    %6 = vsyncpa [#allocation3], 0
    %s7 = scalar_lea.sflag [#allocation3], 1
    %8 = vsyncpa %s7, 0
    %9 = vsyncpa [#allocation4], 0
    %s10 = scalar_lea.sflag [#allocation4], 1
    %11 = vsyncpa %s10, 0
    loop: start=0, step=1, limit=4
    $region2: #{tpu_custom_call.1} parent=1 // loop_pre_header
      _
    $region3: #{tpu_custom_call.1} parent=1 // loop_header
      %s13 = sphi 0, %s17
      %p14 = scmp.ge.s32.totalorder %s13, 4
      %s20 = sphi 0, %s32
      %s21 = sphi 0, %s28
      %s22 = sphi 0, %s20
      %s23 = sphi 0, %s21
      %s24 = sphi 0, %s22
      %s25 = sphi 0, %s23
      %s37 = sphi 0, %s39
      %s40 = sphi 0, %s37
      %s41 = sphi 0, %s40
      %s57 = sphi 0, %s41
      %s65 = sphi 0, %s67
      %s68 = sphi 0, %s65
      %s69 = sphi 0, %s68
      %s85 = sphi 0, %s69
    $region4: #{tpu_custom_call.1} parent=1 // loop_header_branch
      %16 = sbr.rel (%p14) target = $region8
    $region5: #{tpu_custom_call.1} parent=1 // loop_body
      %s18 = ssub.s32 %s13, 1
      %s19 = ssub.s32 %s13, 2
      %s26 = sadd.s32 1, %s21
      %p27 = scmp.ge.s32.totalorder %s26, 1
      %s28 = scalar_select %p27, 0, %s26
      %s29 = sadd.s32 1, %s20
      %s30 = scalar_select %p27, %s29, %s20
      %p31 = scmp.ge.s32.totalorder %s30, 2
      %s32 = scalar_select %p31, 0, %s30
      %s33 = ssub.s32 %s20, %s32
      %s34 = ssub.s32 %s21, %s28
      %s35 = sor.u32 %s33, %s34
      %p36 = scmp.eq.s32.totalorder %s35, 0
      %s38 = sadd.s32 %s37, 1
      %s39 = scalar_select %p36, %s37, %s38
      %p42 = pneg %p36
      %p43 = scmp.eq.s32.totalorder %s13, 1
      %p44 = por %p42, %p43
      %p45 = scmp.ne.s32.totalorder %s37, %s40
      %p46 = scmp.eq.s32.totalorder %s13, 0
      %p47 = por %p45, %p46
      %p48 = scmp.ne.s32.totalorder %s37, %s40
      %p49 = scmp.eq.s32.totalorder %s18, 1
      %p50 = por %p48, %p49
      %p51 = scmp.ne.s32.totalorder %s40, %s41
      %p52 = scmp.eq.s32.totalorder %s18, 0
      %p53 = por %p51, %p52
      %p54 = scmp.ne.s32.totalorder %s40, %s41
      %p55 = scmp.eq.s32.totalorder %s19, 1
      %p56 = por %p54, %p55
      %p58 = scmp.ne.s32.totalorder %s41, %s57
      %p59 = scmp.eq.s32.totalorder %s19, 0
      %p60 = por %p58, %p59
      %s61 = ssub.s32 %s20, %s32
      %s62 = ssub.s32 %s21, %s28
      %s63 = sor.u32 %s61, %s62
      %p64 = scmp.eq.s32.totalorder %s63, 0
      %s66 = sadd.s32 %s65, 1
      %s67 = scalar_select %p64, %s65, %s66
      %p70 = pneg %p64
      %p71 = scmp.eq.s32.totalorder %s13, 1
      %p72 = por %p70, %p71
      %p73 = scmp.ne.s32.totalorder %s65, %s68
      %p74 = scmp.eq.s32.totalorder %s13, 0
      %p75 = por %p73, %p74
      %p76 = scmp.ne.s32.totalorder %s65, %s68
      %p77 = scmp.eq.s32.totalorder %s18, 1
      %p78 = por %p76, %p77
      %p79 = scmp.ne.s32.totalorder %s68, %s69
      %p80 = scmp.eq.s32.totalorder %s18, 0
      %p81 = por %p79, %p80
      %p82 = scmp.ne.s32.totalorder %s68, %s69
      %p83 = scmp.eq.s32.totalorder %s19, 1
      %p84 = por %p82, %p83
      %p86 = scmp.ne.s32.totalorder %s69, %s85
      %p87 = scmp.eq.s32.totalorder %s19, 0
      %p88 = por %p86, %p87
      %p89 = scmp.le.s32.totalorder 1, %s13
      %p90 = scmp.lt.s32.totalorder %s13, 3
      %p91 = pnand %p89, %p90
      %p92 = pneg %p91
      // Predicated region
      $region9: #{tpu_custom_call.1} parent=5 // pred_check
        _
      $region10: #{tpu_custom_call.1} parent=5 // pred_check_branch
        %94 = sbr.rel (%p91) target = $region12
      $region11: #{tpu_custom_call.1} parent=5 // pred_region
        %s95 = ssub.s32 %s13, 1
      $region12: #{tpu_custom_call.1} parent=5 // pred_fallthru
        _
      %p96 = scmp.lt.s32.totalorder %s13, 2
      // Predicated region
      $region13: #{tpu_custom_call.1} parent=5 // pred_check
        %p97 = pneg %p96
      $region14: #{tpu_custom_call.1} parent=5 // pred_check_branch
        %99 = sbr.rel (%p97) target = $region16
      $region15: #{tpu_custom_call.1} parent=5 // pred_region
        // Predicated region
        $region17: #{tpu_custom_call.1} parent=15 // pred_check
          %p100 = pneg %p47
        $region18: #{tpu_custom_call.1} parent=15 // pred_check_branch
          %102 = sbr.rel (%p100) target = $region20
        $region19: #{tpu_custom_call.1} parent=15 // pred_region
          %s103 = sand.u32 %s37, 1
          %s104 = scalar_lea.sflag [#allocation3], %s103
          %s105 = sand.u32 %s37, 1
          %s106 = smul.addr %s105, 8
          %s107 = scalar_lea.vmem [#allocation2], %s106
          %109 = vsyncadd %s104, 0
          %s110 = sadd.s32 %s21, %s20
          %s111 = smul.addr %s110, 8
          %s112 = scalar_lea.hbm %s0, %s111
          %s114 = sshll.u32 %s112, 4
          %s115 = int_to_ptr.hbm [resolvable:$true] %s114
          %s116 = sshll.u32 %s107, 4
          %s117 = int_to_ptr.vmem [resolvable:$true] %s116
          %119 = dma.hbm_to_vmem [thread:$0]  %s115, 128, %s117, %s104
        $region20: #{tpu_custom_call.1} parent=15 // pred_fallthru
          _
      $region16: #{tpu_custom_call.1} parent=5 // pred_fallthru
        _
      %p120 = scmp.le.s32.totalorder 1, %s13
      %p121 = scmp.lt.s32.totalorder %s13, 3
      %p122 = pnand %p120, %p121
      %p123 = pneg %p122
      // Predicated region
      $region21: #{tpu_custom_call.1} parent=5 // pred_check
        _
      $region22: #{tpu_custom_call.1} parent=5 // pred_check_branch
        %125 = sbr.rel (%p122) target = $region24
      $region23: #{tpu_custom_call.1} parent=5 // pred_region
        %s126 = ssub.s32 %s13, 1
        %s127 = sand.u32 %s40, 1
        %s128 = scalar_lea.sflag [#allocation3], %s127
        %s129 = sand.u32 %s40, 1
        %s130 = smul.addr %s129, 8
        %s131 = scalar_lea.vmem [#allocation2], %s130
        // Predicated region
        $region25: #{tpu_custom_call.1} parent=23 // pred_check
          %p132 = pneg %p53
        $region26: #{tpu_custom_call.1} parent=23 // pred_check_branch
          %134 = sbr.rel (%p132) target = $region28
        $region27: #{tpu_custom_call.1} parent=23 // pred_region
          %136 = dma.done %s128, 128
        $region28: #{tpu_custom_call.1} parent=23 // pred_fallthru
          _
        %s137 = sand.u32 %s40, 1
        %s138 = scalar_lea.sflag [#allocation3], %s137
        %s139 = sand.u32 %s40, 1
        %s140 = smul.addr %s139, 8
        %s141 = scalar_lea.vmem [#allocation2], %s140
        %p142 = pneg %p53
        %p143 = pneg %p50
        %p144 = pneg %p81
        %p145 = pneg %p78
        %s146 = sand.u32 %s68, 1
        %s147 = scalar_lea.sflag [#allocation4], %s146
        %s148 = sand.u32 %s68, 1
        %s149 = smul.addr %s148, 8
        %s150 = scalar_lea.vmem [#allocation5], %s149
        %v151 = vld [vmem:[%s131] sm:$0xff]
        %v152 = vsub.f32 %v151, 0.5
        %v153 = vmul.f32 %v152, 4.4444447
        %154 = vst [vmem:[%s150] sm:$0xff] %v153
        %s155 = sand.u32 %s68, 1
        %s156 = scalar_lea.sflag [#allocation4], %s155
        %s157 = sand.u32 %s68, 1
        %s158 = smul.addr %s157, 8
        %s159 = scalar_lea.vmem [#allocation5], %s158
        // Predicated region
        $region29: #{tpu_custom_call.1} parent=23 // pred_check
          %p160 = pneg %p78
        $region30: #{tpu_custom_call.1} parent=23 // pred_check_branch
          %162 = sbr.rel (%p160) target = $region32
        $region31: #{tpu_custom_call.1} parent=23 // pred_region
          %164 = vsyncadd %s156, 0
          %s165 = sadd.s32 %s23, %s22
          %s166 = smul.addr %s165, 8
          %s167 = scalar_lea.hbm %s1, %s166
          %s169 = sshll.u32 %s159, 4
          %s170 = int_to_ptr.vmem [resolvable:$true] %s169
          %s171 = sshll.u32 %s167, 4
          %s172 = int_to_ptr.hbm [resolvable:$true] %s171
          %174 = dma.vmem_to_hbm [thread:$0]  %s170, 128, %s172, %s156
        $region32: #{tpu_custom_call.1} parent=23 // pred_fallthru
          _
      $region24: #{tpu_custom_call.1} parent=5 // pred_fallthru
        _
      %p175 = scmp.le.s32.totalorder 2, %s13
      // Predicated region
      $region33: #{tpu_custom_call.1} parent=5 // pred_check
        %p176 = pneg %p175
      $region34: #{tpu_custom_call.1} parent=5 // pred_check_branch
        %178 = sbr.rel (%p176) target = $region36
      $region35: #{tpu_custom_call.1} parent=5 // pred_region
        %s179 = ssub.s32 %s13, 2
        // Predicated region
        $region37: #{tpu_custom_call.1} parent=35 // pred_check
          %p180 = pneg %p84
        $region38: #{tpu_custom_call.1} parent=35 // pred_check_branch
          %182 = sbr.rel (%p180) target = $region40
        $region39: #{tpu_custom_call.1} parent=35 // pred_region
          %s183 = sand.u32 %s69, 1
          %s184 = scalar_lea.sflag [#allocation4], %s183
          %s185 = sand.u32 %s69, 1
          %s186 = smul.addr %s185, 8
          %s187 = scalar_lea.vmem [#allocation5], %s186
          %189 = dma.done %s184, 128
        $region40: #{tpu_custom_call.1} parent=35 // pred_fallthru
          _
      $region36: #{tpu_custom_call.1} parent=5 // pred_fallthru
        _
    $region6: #{tpu_custom_call.1} parent=1 // loop_footer
      %s17 = sadd.s32 1, %s13
    $region7: #{tpu_custom_call.1} parent=1 // loop_footer_branch
      %12 = sbr.rel target = $region3
    $region8: #{tpu_custom_call.1} parent=1 // loop_exit
      _
    %190 = vsyncpa [#allocation3], 1
    %s191 = scalar_lea.sflag [#allocation3], 1
    %192 = vsyncpa %s191, 1
    %193 = vsyncpa [#allocation4], 1
    %s194 = scalar_lea.sflag [#allocation4], 1
    %195 = vsyncpa %s194, 1

</llo_original>
